<compile_context>
chip_gen: v6e
topology: v6e:2x2x1
jax: 0.10.0
libtpu: 0.0.40
codegen_flags: <defaults>
</compile_context>

<pallas_src>
import functools

import jax
import jax.numpy as jnp
from jax.experimental import pallas as pl
from jax.experimental.pallas import tpu as pltpu

LANES = 128                 # lane width: batch elements per vreg row
DEFAULT_BLOCK_ROWS = 2048   # sublane rows per grid step (2048*128*4B = 1 MiB f32 tile)

# Packed-parameter layout (flat float32[19]):
#   [ 0: 2)  fc1 W (1,2) row-major   [ 2: 4) fc1 b
#   [ 4: 8)  fc2 W (2,2) row-major   [ 8:10) fc2 b
#   [10:14)  fc3 W (2,2) row-major   [14:16) fc3 b
#   [16:18)  fc4 W (2,1) row-major   [18]    fc4 b
N_PARAMS = 19


def _round_up(v, m):
    return ((v + m - 1) // m) * m


def _mlp_kernel(p_ref, x_ref, o_ref, *, compute_dtype):
    """x_ref/o_ref: (tb, 128) tiles of batch scalars; p_ref: float32[19] in SMEM."""
    cdt = compute_dtype
    x = x_ref[...].astype(cdt)
    # 19 scalar loads from SMEM, splatted across the tile by the VPU.
    w = [p_ref[i].astype(cdt) for i in range(N_PARAMS)]
    zero = jnp.zeros((), cdt)

    # fc1 (1 -> 2) + ReLU : pure scalar-broadcast FMAs.
    h0 = jnp.maximum(x * w[0] + w[2], zero)
    h1 = jnp.maximum(x * w[1] + w[3], zero)
    # fc2 (2 -> 2) + ReLU
    g0 = jnp.maximum(h0 * w[4] + h1 * w[6] + w[8], zero)
    g1 = jnp.maximum(h0 * w[5] + h1 * w[7] + w[9], zero)
    # fc3 (2 -> 2) + ReLU
    f0 = jnp.maximum(g0 * w[10] + g1 * w[12] + w[14], zero)
    f1 = jnp.maximum(g0 * w[11] + g1 * w[13] + w[15], zero)
    # fc4 (2 -> 1)
    o_ref[...] = (f0 * w[16] + f1 * w[17] + w[18]).astype(o_ref.dtype)


def _pack_params(params):
    """Concatenate all real-sized weights/biases into a flat float32[19]."""
    w1, b1 = params["fc1"]
    w2, b2 = params["fc2"]
    w3, b3 = params["fc3"]
    w4, b4 = params["fc4"]
    flat = jnp.concatenate([
        w1.reshape(-1), b1.reshape(-1),
        w2.reshape(-1), b2.reshape(-1),
        w3.reshape(-1), b3.reshape(-1),
        w4.reshape(-1), b4.reshape(-1),
    ]).astype(jnp.float32)
    assert flat.shape == (N_PARAMS,)
    return flat


def ai85net_fir_slab(x2d, p_flat, *, block_rows=DEFAULT_BLOCK_ROWS,
                     compute_dtype=None):
    """Slab-native forward: x2d is a lane-dense (rows, 128) slab of batch scalars.

    No padding / reshaping copies are added around the pallas_call; callers
    that keep activations in slab form pay only the kernel's own in+out HBM
    traffic.  Rows must be a multiple of 8.  Padded lanes (if any) compute
    f(garbage) and must be ignored by the caller.
    """
    rows, lanes = x2d.shape
    assert lanes == LANES
    assert rows % 8 == 0, "slab rows must be sublane-aligned (multiple of 8)"
    out_dtype = x2d.dtype
    cdt = jnp.dtype(compute_dtype) if compute_dtype is not None else jnp.dtype(out_dtype)

    # Block choice: large tiles for big batches (amortize per-step overhead),
    # but always >= 2 grid steps when possible so the "parallel" batch axis
    # shards across both TensorCores on v7x.
    if rows >= 16:
        tb = min(block_rows, _round_up(pl.cdiv(rows, 2), 8))
    else:
        tb = rows
    tb = max(8, _round_up(tb, 8))
    grid = (pl.cdiv(rows, tb),)   # partial last block is masked by Pallas

    in_bytes = rows * LANES * jnp.dtype(x2d.dtype).itemsize
    out_bytes = rows * LANES * jnp.dtype(out_dtype).itemsize
    cost = pl.CostEstimate(
        flops=30 * rows * LANES,          # ~12 FMAs + adds + ReLUs per element
        transcendentals=0,
        bytes_accessed=in_bytes + out_bytes + 4 * N_PARAMS,
    )

    kernel = functools.partial(_mlp_kernel, compute_dtype=cdt)
    return pl.pallas_call(
        kernel,
        out_shape=jax.ShapeDtypeStruct((rows, LANES), out_dtype),
        grid_spec=pltpu.PrefetchScalarGridSpec(
            num_scalar_prefetch=0,
            grid=grid,
            in_specs=[
                pl.BlockSpec(memory_space=pltpu.MemorySpace.SMEM),  # params
                pl.BlockSpec((tb, LANES), lambda i: (i, 0)),        # x tile
            ],
            out_specs=pl.BlockSpec((tb, LANES), lambda i: (i, 0)),
        ),
        compiler_params=pltpu.CompilerParams(
            dimension_semantics=("parallel",)),
        cost_estimate=cost,
    )(p_flat, x2d)


def ai85net_fir_forward(x, params, *, block_rows=DEFAULT_BLOCK_ROWS,
                        compute_dtype=None):
    """(N, 1) convenience wrapper around the slab-native kernel.

    Pads only when needed (n not a multiple of 128), only up to a sublane-
    aligned row count, and preserves the input dtype on the output.
    """
    n, fin = x.shape
    assert fin == 1
    rows = max(8, _round_up(pl.cdiv(n, LANES), 8))
    n_slab = rows * LANES

    flat = x.reshape(-1)
    if n_slab != n:
        flat = jnp.pad(flat, (0, n_slab - n))
    x2d = flat.reshape(rows, LANES)

    p_flat = _pack_params(params)
    out2d = ai85net_fir_slab(x2d, p_flat, block_rows=block_rows,
                             compute_dtype=compute_dtype)
    return out2d.reshape(-1)[:n].reshape(n, 1)


def _init_linear(key, fan_in, fan_out):
    """Deterministic PyTorch-like init: U(-1/sqrt(fan_in), 1/sqrt(fan_in))."""
    kw, kb = jax.random.split(key)
    bound = 1.0 / jnp.sqrt(jnp.float32(fan_in))
    w = jax.random.uniform(kw, (fan_in, fan_out), jnp.float32, -bound, bound)
    b = jax.random.uniform(kb, (fan_out,), jnp.float32, -bound, bound)
    return w, b


def _reference_forward(x, params):
    def lin(h, w, b):
        return h @ w + b
    h = jnp.maximum(lin(x, *params["fc1"]), 0.0)
    h = jnp.maximum(lin(h, *params["fc2"]), 0.0)
    h = jnp.maximum(lin(h, *params["fc3"]), 0.0)
    return lin(h, *params["fc4"])


if __name__ == "__main__":
    key = jax.random.PRNGKey(0)
    k_x, k1, k2, k3, k4 = jax.random.split(key, 5)

    params = {
        "fc1": _init_linear(k1, 1, 2),
        "fc2": _init_linear(k2, 2, 2),
        "fc3": _init_linear(k3, 2, 2),
        "fc4": _init_linear(k4, 2, 1),
    }

    # 1) Small f32 batch (single grid step).
    batch = 8
    x = jax.random.normal(k_x, (batch, 1), jnp.float32)
    out = jax.block_until_ready(ai85net_fir_forward(x, params))
    ref = _reference_forward(x, params)
    assert out.shape == (batch, 1) and out.dtype == jnp.float32, (out.shape, out.dtype)
    assert jnp.allclose(out, ref, atol=1e-5, rtol=1e-5)

    # 2) Larger, non-128-aligned f32 batch: exercises minimal input padding,
    #    grid=2 (v7x two-TensorCore split) and the tail slice.
    batch2 = 2000
    x2 = jax.random.normal(jax.random.PRNGKey(1), (batch2, 1), jnp.float32)
    out2 = jax.block_until_ready(ai85net_fir_forward(x2, params))
    ref2 = _reference_forward(x2, params)
    assert out2.shape == (batch2, 1), out2.shape
    assert jnp.allclose(out2, ref2, atol=1e-5, rtol=1e-5)

    # 3) bf16 path (v6e/v7x recipe: bf16 I/O + bf16 VALU compute), with a
    #    partial last block (rows=24, tb=16, grid=2).  Loose tolerance vs the
    #    f32 reference because of bf16 rounding.
    batch3 = 3000
    x3 = jax.random.normal(jax.random.PRNGKey(2), (batch3, 1), jnp.float32)
    out3 = jax.block_until_ready(
        ai85net_fir_forward(x3.astype(jnp.bfloat16), params))
    ref3 = _reference_forward(x3, params)
    assert out3.shape == (batch3, 1) and out3.dtype == jnp.bfloat16, (out3.shape, out3.dtype)
    assert jnp.allclose(out3.astype(jnp.float32), ref3, atol=0.1, rtol=0.1)

    print("KERNEL_OK")
</pallas_src>

<mosaic_0001>
module attributes {stable_mosaic.version = 11 : i64} {
  func.func @_mlp_kernel(%arg0: i32, %arg1: memref<19xf32, #tpu.memory_space<smem>>, %arg2: memref<8x128xf32, #tpu.memory_space<vmem>>, %arg3: memref<8x128xf32, #tpu.memory_space<vmem>>) attributes {dimension_semantics = [#tpu.dimension_semantics<parallel>], iteration_bounds = array<i64: 1>, scalar_prefetch = 0 : i64, scratch_operands = 0 : i64, tpu.core_type = #tpu.core_type<tc>, window_params = [{transform_indices = @transform_0, window_bounds = array<i64: 19>}, {transform_indices = @transform_1, window_bounds = array<i64: 8, 128>}, {transform_indices = @transform_2, window_bounds = array<i64: 8, 128>}]} {
    %c0 = arith.constant 0 : index
    %c0_0 = arith.constant 0 : index
    %0 = vector.load %arg2[%c0, %c0_0] : memref<8x128xf32, #tpu.memory_space<vmem>>, vector<8x128xf32>
    %c0_1 = arith.constant 0 : index
    %1 = memref.load %arg1[%c0_1] : memref<19xf32, #tpu.memory_space<smem>>
    %c1 = arith.constant 1 : index
    %2 = memref.load %arg1[%c1] : memref<19xf32, #tpu.memory_space<smem>>
    %c2 = arith.constant 2 : index
    %3 = memref.load %arg1[%c2] : memref<19xf32, #tpu.memory_space<smem>>
    %c3 = arith.constant 3 : index
    %4 = memref.load %arg1[%c3] : memref<19xf32, #tpu.memory_space<smem>>
    %c4 = arith.constant 4 : index
    %5 = memref.load %arg1[%c4] : memref<19xf32, #tpu.memory_space<smem>>
    %c5 = arith.constant 5 : index
    %6 = memref.load %arg1[%c5] : memref<19xf32, #tpu.memory_space<smem>>
    %c6 = arith.constant 6 : index
    %7 = memref.load %arg1[%c6] : memref<19xf32, #tpu.memory_space<smem>>
    %c7 = arith.constant 7 : index
    %8 = memref.load %arg1[%c7] : memref<19xf32, #tpu.memory_space<smem>>
    %c8 = arith.constant 8 : index
    %9 = memref.load %arg1[%c8] : memref<19xf32, #tpu.memory_space<smem>>
    %c9 = arith.constant 9 : index
    %10 = memref.load %arg1[%c9] : memref<19xf32, #tpu.memory_space<smem>>
    %c10 = arith.constant 10 : index
    %11 = memref.load %arg1[%c10] : memref<19xf32, #tpu.memory_space<smem>>
    %c11 = arith.constant 11 : index
    %12 = memref.load %arg1[%c11] : memref<19xf32, #tpu.memory_space<smem>>
    %c12 = arith.constant 12 : index
    %13 = memref.load %arg1[%c12] : memref<19xf32, #tpu.memory_space<smem>>
    %c13 = arith.constant 13 : index
    %14 = memref.load %arg1[%c13] : memref<19xf32, #tpu.memory_space<smem>>
    %c14 = arith.constant 14 : index
    %15 = memref.load %arg1[%c14] : memref<19xf32, #tpu.memory_space<smem>>
    %c15 = arith.constant 15 : index
    %16 = memref.load %arg1[%c15] : memref<19xf32, #tpu.memory_space<smem>>
    %c16 = arith.constant 16 : index
    %17 = memref.load %arg1[%c16] : memref<19xf32, #tpu.memory_space<smem>>
    %c17 = arith.constant 17 : index
    %18 = memref.load %arg1[%c17] : memref<19xf32, #tpu.memory_space<smem>>
    %c18 = arith.constant 18 : index
    %19 = memref.load %arg1[%c18] : memref<19xf32, #tpu.memory_space<smem>>
    %20 = vector.broadcast %1 : f32 to vector<8x128xf32>
    %21 = arith.mulf %0, %20 : vector<8x128xf32>
    %22 = vector.broadcast %3 : f32 to vector<8x128xf32>
    %23 = arith.addf %21, %22 : vector<8x128xf32>
    %cst = arith.constant 0.000000e+00 : f32
    %24 = vector.broadcast %cst : f32 to vector<8x128xf32>
    %25 = arith.maximumf %23, %24 : vector<8x128xf32>
    %26 = vector.broadcast %2 : f32 to vector<8x128xf32>
    %27 = arith.mulf %0, %26 : vector<8x128xf32>
    %28 = vector.broadcast %4 : f32 to vector<8x128xf32>
    %29 = arith.addf %27, %28 : vector<8x128xf32>
    %cst_2 = arith.constant 0.000000e+00 : f32
    %30 = vector.broadcast %cst_2 : f32 to vector<8x128xf32>
    %31 = arith.maximumf %29, %30 : vector<8x128xf32>
    %32 = vector.broadcast %5 : f32 to vector<8x128xf32>
    %33 = arith.mulf %25, %32 : vector<8x128xf32>
    %34 = vector.broadcast %7 : f32 to vector<8x128xf32>
    %35 = arith.mulf %31, %34 : vector<8x128xf32>
    %36 = arith.addf %33, %35 : vector<8x128xf32>
    %37 = vector.broadcast %9 : f32 to vector<8x128xf32>
    %38 = arith.addf %36, %37 : vector<8x128xf32>
    %cst_3 = arith.constant 0.000000e+00 : f32
    %39 = vector.broadcast %cst_3 : f32 to vector<8x128xf32>
    %40 = arith.maximumf %38, %39 : vector<8x128xf32>
    %41 = vector.broadcast %6 : f32 to vector<8x128xf32>
    %42 = arith.mulf %25, %41 : vector<8x128xf32>
    %43 = vector.broadcast %8 : f32 to vector<8x128xf32>
    %44 = arith.mulf %31, %43 : vector<8x128xf32>
    %45 = arith.addf %42, %44 : vector<8x128xf32>
    %46 = vector.broadcast %10 : f32 to vector<8x128xf32>
    %47 = arith.addf %45, %46 : vector<8x128xf32>
    %cst_4 = arith.constant 0.000000e+00 : f32
    %48 = vector.broadcast %cst_4 : f32 to vector<8x128xf32>
    %49 = arith.maximumf %47, %48 : vector<8x128xf32>
    %50 = vector.broadcast %11 : f32 to vector<8x128xf32>
    %51 = arith.mulf %40, %50 : vector<8x128xf32>
    %52 = vector.broadcast %13 : f32 to vector<8x128xf32>
    %53 = arith.mulf %49, %52 : vector<8x128xf32>
    %54 = arith.addf %51, %53 : vector<8x128xf32>
    %55 = vector.broadcast %15 : f32 to vector<8x128xf32>
    %56 = arith.addf %54, %55 : vector<8x128xf32>
    %cst_5 = arith.constant 0.000000e+00 : f32
    %57 = vector.broadcast %cst_5 : f32 to vector<8x128xf32>
    %58 = arith.maximumf %56, %57 : vector<8x128xf32>
    %59 = vector.broadcast %12 : f32 to vector<8x128xf32>
    %60 = arith.mulf %40, %59 : vector<8x128xf32>
    %61 = vector.broadcast %14 : f32 to vector<8x128xf32>
    %62 = arith.mulf %49, %61 : vector<8x128xf32>
    %63 = arith.addf %60, %62 : vector<8x128xf32>
    %64 = vector.broadcast %16 : f32 to vector<8x128xf32>
    %65 = arith.addf %63, %64 : vector<8x128xf32>
    %cst_6 = arith.constant 0.000000e+00 : f32
    %66 = vector.broadcast %cst_6 : f32 to vector<8x128xf32>
    %67 = arith.maximumf %65, %66 : vector<8x128xf32>
    %68 = vector.broadcast %17 : f32 to vector<8x128xf32>
    %69 = arith.mulf %58, %68 : vector<8x128xf32>
    %70 = vector.broadcast %18 : f32 to vector<8x128xf32>
    %71 = arith.mulf %67, %70 : vector<8x128xf32>
    %72 = arith.addf %69, %71 : vector<8x128xf32>
    %73 = vector.broadcast %19 : f32 to vector<8x128xf32>
    %74 = arith.addf %72, %73 : vector<8x128xf32>
    %c0_7 = arith.constant 0 : index
    %c0_8 = arith.constant 0 : index
    %75 = vector.load %arg3[%c0_7, %c0_8] : memref<8x128xf32, #tpu.memory_space<vmem>>, vector<8x128xf32>
    tpu.vector_store %arg3[%c0_7, %c0_8], %74 {strides = array<i32>} : memref<8x128xf32, #tpu.memory_space<vmem>>, vector<8x128xf32>,
    return
  }
  func.func @transform_0(%arg0: i32) -> i32 {
    %c0_i32 = arith.constant 0 : i32
    %c0_i32_0 = arith.constant 0 : i32
    return %c0_i32 : i32
  }
  func.func @transform_1(%arg0: i32) -> (i32, i32) {
    %c0_i32 = arith.constant 0 : i32
    %c0_i32_0 = arith.constant 0 : i32
    return %arg0, %c0_i32 : i32, i32
  }
  func.func @transform_2(%arg0: i32) -> (i32, i32) {
    %c0_i32 = arith.constant 0 : i32
    %c0_i32_0 = arith.constant 0 : i32
    return %arg0, %c0_i32 : i32, i32
  }
}

</mosaic_0001>

<llo_original>
// kernel: tpu_custom_call.1
$region0: #{tpu_custom_call.1}
  #allocation0 [shape = 'u32[]', space=smem, size = 0x4, offset = 0x4, fixed_abs, tag = 'smem constant byte address 0x4 - core index']
  #allocation1 [shape = 'u32[144,128]{1,0:T(1,128)}', space=vmem, size = 0x12000, scoped, tag = 'internal scratch']
  %s0 = inlined_call_operand.hbm [shape: f32[19], index: 0, kind: input, shape index: {}]
  %s1 = inlined_call_operand.hbm [shape: f32[8,128], index: 1, kind: input, shape index: {}]
  %s2 = inlined_call_operand.hbm [shape: f32[8,128], index: 2, kind: output, shape index: {}]
  %s3 = sld [smem:[#allocation0]]
  $region26: #{tpu_custom_call.1} parent=0
    _
  %s5 = ssub.s32 1, %s3
  %s6 = scalar_select 0, %s5, %s3
  $region1: #{tpu_custom_call.1} parent=0
    #allocation2 [shape = 'u8[512]{0}', space=smem, size = 0x200, scoped, tag = 'input window, operand 0, single buffered']
    #allocation3 [shape = 's32[1]{0}', space=sflag, size = 0x4, scoped, tag = 'scoped memory for tpu_custom_call.1']
    #allocation4 [shape = 's32[1]{0}', space=sflag, size = 0x4, scoped, tag = 'scoped memory for tpu_custom_call.1']
    #allocation5 [shape = 's32[1]{0}', space=sflag, size = 0x4, scoped, tag = 'scoped memory for tpu_custom_call.1']
    #allocation6 [shape = 'u8[4096]{0}', space=vmem, size = 0x1000, scoped, tag = 'input window, operand 1, single buffered']
    #allocation7 [shape = 'u8[4096]{0}', space=vmem, size = 0x1000, scoped, tag = 'output window, operand 0, single buffered']
    %7 = vsyncpa [#allocation5], 0
    %8 = vsyncpa [#allocation3], 0
    %9 = vsyncpa [#allocation4], 0
    // Predicated region
    $region2: #{tpu_custom_call.1} parent=1 // pred_check
      _
    $region3: #{tpu_custom_call.1} parent=1 // pred_check_branch
      %11 = sbr.rel (0) target = $region5
    $region4: #{tpu_custom_call.1} parent=1 // pred_region
      %s13 = ssub.s32 16, 16
      %14 = vsyncadd [#allocation5], %s13
      %17 = dma.hbm_to_smem %s0, 16, [#allocation2], [#allocation5]
    $region5: #{tpu_custom_call.1} parent=1 // pred_fallthru
      _
    // Predicated region
    $region6: #{tpu_custom_call.1} parent=1 // pred_check
      _
    $region7: #{tpu_custom_call.1} parent=1 // pred_check_branch
      %19 = sbr.rel (0) target = $region9
    $region8: #{tpu_custom_call.1} parent=1 // pred_region
      %s21 = ssub.s32 128, 128
      %22 = vsyncadd [#allocation3], %s21
      %s24 = sshll.u32 [#allocation6], 4
      %s25 = int_to_ptr.vmem [resolvable:$true] %s24
      %27 = dma.hbm_to_vmem [thread:$0]  %s1, 128, %s25, [#allocation3]
    $region9: #{tpu_custom_call.1} parent=1 // pred_fallthru
      _
    // Predicated region
    $region10: #{tpu_custom_call.1} parent=1 // pred_check
      _
    $region11: #{tpu_custom_call.1} parent=1 // pred_check_branch
      %29 = sbr.rel (0) target = $region13
    $region12: #{tpu_custom_call.1} parent=1 // pred_region
      %30 = dma.done [#allocation5], 16
    $region13: #{tpu_custom_call.1} parent=1 // pred_fallthru
      _
    // Predicated region
    $region14: #{tpu_custom_call.1} parent=1 // pred_check
      _
    $region15: #{tpu_custom_call.1} parent=1 // pred_check_branch
      %32 = sbr.rel (0) target = $region17
    $region16: #{tpu_custom_call.1} parent=1 // pred_region
      %33 = dma.done [#allocation3], 128
    $region17: #{tpu_custom_call.1} parent=1 // pred_fallthru
      _
    %34 = sfence
    %v35 = vld [vmem:[#allocation6] sm:$0xff]
    %s36 = sld [smem:[#allocation2]]
    %s37 = sld [smem:[#allocation2 + $0x1]]
    %s38 = sld [smem:[#allocation2 + $0x2]]
    %s39 = sld [smem:[#allocation2 + $0x3]]
    %s40 = sld [smem:[#allocation2 + $0x4]]
    %s41 = sld [smem:[#allocation2 + $0x5]]
    %s42 = sld [smem:[#allocation2 + $0x6]]
    %s43 = sld [smem:[#allocation2 + $0x7]]
    %s44 = sld [smem:[#allocation2 + $0x8]]
    %s45 = sld [smem:[#allocation2 + $0x9]]
    %s46 = sld [smem:[#allocation2 + $0xa]]
    %s47 = sld [smem:[#allocation2 + $0xb]]
    %s48 = sld [smem:[#allocation2 + $0xc]]
    %s49 = sld [smem:[#allocation2 + $0xd]]
    %s50 = sld [smem:[#allocation2 + $0xe]]
    %s51 = sld [smem:[#allocation2 + $0xf]]
    %s52 = sld [smem:[#allocation2 + $0x10]]
    %s53 = sld [smem:[#allocation2 + $0x11]]
    %s54 = sld [smem:[#allocation2 + $0x12]]
    %v55 = vstv %s36
    %v56 = vmul.f32 %v35, %v55
    %v57 = vstv %s38
    %v58 = vadd.f32 %v56, %v57
    %v59 = vmax.f32 %v58, 0.0
    %v60 = vstv %s37
    %v61 = vmul.f32 %v35, %v60
    %v62 = vstv %s39
    %v63 = vadd.f32 %v61, %v62
    %v64 = vmax.f32 %v63, 0.0
    %v65 = vstv %s40
    %v66 = vmul.f32 %v59, %v65
    %v67 = vstv %s42
    %v68 = vmul.f32 %v64, %v67
    %v69 = vadd.f32 %v66, %v68
    %v70 = vstv %s44
    %v71 = vadd.f32 %v69, %v70
    %v72 = vmax.f32 %v71, 0.0
    %v73 = vstv %s41
    %v74 = vmul.f32 %v59, %v73
    %v75 = vstv %s43
    %v76 = vmul.f32 %v64, %v75
    %v77 = vadd.f32 %v74, %v76
    %v78 = vstv %s45
    %v79 = vadd.f32 %v77, %v78
    %v80 = vmax.f32 %v79, 0.0
    %v81 = vstv %s46
    %v82 = vmul.f32 %v72, %v81
    %v83 = vstv %s48
    %v84 = vmul.f32 %v80, %v83
    %v85 = vadd.f32 %v82, %v84
    %v86 = vstv %s50
    %v87 = vadd.f32 %v85, %v86
    %v88 = vmax.f32 %v87, 0.0
    %v89 = vstv %s47
    %v90 = vmul.f32 %v72, %v89
    %v91 = vstv %s49
    %v92 = vmul.f32 %v80, %v91
    %v93 = vadd.f32 %v90, %v92
    %v94 = vstv %s51
    %v95 = vadd.f32 %v93, %v94
    %v96 = vmax.f32 %v95, 0.0
    %v97 = vstv %s52
    %v98 = vmul.f32 %v88, %v97
    %v99 = vstv %s53
    %v100 = vmul.f32 %v96, %v99
    %v101 = vadd.f32 %v98, %v100
    %v102 = vstv %s54
    %v103 = vadd.f32 %v101, %v102
    %104 = vst [vmem:[#allocation7] sm:$0xff] %v103
    // Predicated region
    $region18: #{tpu_custom_call.1} parent=1 // pred_check
      _
    $region19: #{tpu_custom_call.1} parent=1 // pred_check_branch
      %106 = sbr.rel (0) target = $region21
    $region20: #{tpu_custom_call.1} parent=1 // pred_region
      %s108 = ssub.s32 128, 128
      %109 = vsyncadd [#allocation4], %s108
      %s111 = sshll.u32 [#allocation7], 4
      %s112 = int_to_ptr.vmem [resolvable:$true] %s111
      %114 = dma.vmem_to_hbm [thread:$0]  %s112, 128, %s2, [#allocation4]
    $region21: #{tpu_custom_call.1} parent=1 // pred_fallthru
      _
    // Predicated region
    $region22: #{tpu_custom_call.1} parent=1 // pred_check
      _
    $region23: #{tpu_custom_call.1} parent=1 // pred_check_branch
      %116 = sbr.rel (0) target = $region25
    $region24: #{tpu_custom_call.1} parent=1 // pred_region
      %117 = dma.done [#allocation4], 128
    $region25: #{tpu_custom_call.1} parent=1 // pred_fallthru
      _
    %118 = vsyncpa [#allocation3], 1
    %119 = vsyncpa [#allocation4], 1
    %120 = vsyncpa [#allocation5], 1

</llo_original>
